<compile_context>
chip_gen: v7x
topology: tpu7x:2x2x1
jax: 0.10.0
libtpu: 0.0.40
codegen_flags: <defaults>
</compile_context>

<pallas_src>
import jax
import jax.numpy as jnp
from jax.experimental import pallas as pl
from jax.experimental.pallas import tpu as pltpu

LANE = 128  # TPU lane width


def _round_up(n, m):
    return ((n + m - 1) // m) * m


def mlp_kernel(x_ref, w1_ref, b1_ref, w2_ref, b2_ref, w3_ref, b3_ref, o_ref):
    # fc1 + ReLU   (tile, 784)bf16 @ (784, 128)bf16 -> f32
    x = x_ref[...].astype(jnp.bfloat16)
    h1 = jnp.dot(x, w1_ref[...], preferred_element_type=jnp.float32)
    h1 = jnp.maximum(h1 + b1_ref[...], 0.0)
    # fc2 + ReLU   (tile, 128)bf16 @ (128, 128)bf16  (64 real cols, zero-padded)
    h2 = jnp.dot(h1.astype(jnp.bfloat16), w2_ref[...],
                 preferred_element_type=jnp.float32)
    h2 = jnp.maximum(h2 + b2_ref[...], 0.0)
    # fc3 logits   (tile, 128)bf16 @ (128, 10)bf16  (zero-padded K rows are a no-op)
    out = jnp.dot(h2.astype(jnp.bfloat16), w3_ref[...],
                  preferred_element_type=jnp.float32)
    o_ref[...] = (out + b3_ref[...]).astype(o_ref.dtype)


def prepare_params(params):
    """One-time weight prep: zero-pad the 64-wide hidden dim to 128 and cast the
    matmul operands to bf16.  Biases stay f32 (added to the f32 accumulators)."""
    w1, b1, w2, b2, w3, b3 = params
    d_h2 = w2.shape[1]                      # 64
    d_h2p = _round_up(d_h2, LANE)           # 128
    w1p = w1.astype(jnp.bfloat16)                                        # (784, 128)
    w2p = jnp.pad(w2, ((0, 0), (0, d_h2p - d_h2))).astype(jnp.bfloat16)  # (128, 128)
    b2p = jnp.pad(b2, ((0, 0), (0, d_h2p - d_h2)))                       # (1, 128) f32
    w3p = jnp.pad(w3, ((0, d_h2p - d_h2), (0, 0))).astype(jnp.bfloat16)  # (128, 10)
    return (w1p, b1, w2p, b2p, w3p, b3)


def _choose_tile(B, batch_tile):
    tile = min(batch_tile, B)
    # v7x has 2 TensorCores: guarantee >= 2 grid steps when there is enough work so
    # the "parallel" batch axis shards across both cores.
    if B > 256:
        half = _round_up(-(-B // 2), 256)
        tile = min(tile, half)
    return tile


def neural_net_forward(x, prepared_params, *, batch_tile=2048):
    """x: (B, 1, 28, 28) float32  ->  logits (B, 10) float32."""
    w1, b1, w2p, b2p, w3p, b3 = prepared_params
    B = x.shape[0]
    x_flat = x.reshape(B, -1)                       # nn.Flatten()
    d_in = x_flat.shape[1]                          # 784
    d_h1 = w1.shape[1]                              # 128
    d_h2p = w2p.shape[1]                            # 128 (64 real)
    d_out = w3p.shape[1]                            # 10

    tile = _choose_tile(B, batch_tile)
    grid = (pl.cdiv(B, tile),)

    cost = pl.CostEstimate(
        flops=2 * B * (d_in * d_h1 + d_h1 * d_h2p + d_h2p * d_out),
        transcendentals=0,
        bytes_accessed=(B * d_in * 4 + B * d_out * 4
                        + (w1.size + w2p.size + w3p.size) * 2
                        + (b1.size + b2p.size + b3.size) * 4),
    )

    out = pl.pallas_call(
        mlp_kernel,
        out_shape=jax.ShapeDtypeStruct((B, d_out), jnp.float32),
        grid_spec=pltpu.PrefetchScalarGridSpec(
            num_scalar_prefetch=0,
            grid=grid,
            in_specs=[
                pl.BlockSpec((tile, d_in), lambda i: (i, 0)),     # x tile (streamed)
                pl.BlockSpec((d_in, d_h1), lambda i: (0, 0)),     # W1 bf16 (VMEM-resident)
                pl.BlockSpec((1, d_h1), lambda i: (0, 0)),        # b1 f32
                pl.BlockSpec((d_h1, d_h2p), lambda i: (0, 0)),    # W2 bf16 (padded)
                pl.BlockSpec((1, d_h2p), lambda i: (0, 0)),       # b2 f32 (padded)
                pl.BlockSpec((d_h2p, d_out), lambda i: (0, 0)),   # W3 bf16 (K padded)
                pl.BlockSpec((1, d_out), lambda i: (0, 0)),       # b3 f32
            ],
            out_specs=pl.BlockSpec((tile, d_out), lambda i: (i, 0)),
        ),
        compiler_params=pltpu.CompilerParams(
            dimension_semantics=("parallel",),
            vmem_limit_bytes=48 * 1024 * 1024,
        ),
        cost_estimate=cost,
    )(x_flat, w1, b1, w2p, b2p, w3p, b3)

    # TODO(synk): if the upstream producer (e.g. image normalization) can emit bf16 x,
    # accept it directly and skip the in-kernel cast to halve the dominant HBM stream.
    return out


def init_params(key):
    """Deterministic init mimicking nn.Linear defaults: U(-1/sqrt(fan_in), 1/sqrt(fan_in))."""
    dims = [(28 * 28, 128), (128, 64), (64, 10)]
    params = []
    for fan_in, fan_out in dims:
        kw, kb, key = jax.random.split(key, 3)
        bound = 1.0 / jnp.sqrt(float(fan_in))
        w = jax.random.uniform(kw, (fan_in, fan_out), jnp.float32, -bound, bound)
        b = jax.random.uniform(kb, (1, fan_out), jnp.float32, -bound, bound)
        params.extend([w, b])
    return tuple(params)


def reference_forward(x, params):
    w1, b1, w2, b2, w3, b3 = params
    xf = x.reshape(x.shape[0], -1)
    h = jnp.maximum(xf @ w1 + b1, 0.0)
    h = jnp.maximum(h @ w2 + b2, 0.0)
    return h @ w3 + b3


if __name__ == "__main__":
    key = jax.random.PRNGKey(0)
    key_x, key_p = jax.random.split(key)

    params = init_params(key_p)
    prepared = prepare_params(params)   # hoisted pad + bf16 cast (done once)

    # Small MNIST-like batch, NCHW like PyTorch: (B, C, H, W) = (2, 1, 28, 28).
    x = jax.random.normal(key_x, (2, 1, 28, 28), dtype=jnp.float32)
    logits = neural_net_forward(x, prepared)
    jax.block_until_ready(logits)
    assert logits.shape == (2, 10), logits.shape
    ref = reference_forward(x, params)
    # bf16 matmul operands (f32 accumulation) => relaxed tolerance vs. f32 reference.
    assert jnp.allclose(logits, ref, atol=5e-2, rtol=5e-2), (
        float(jnp.max(jnp.abs(logits - ref))))

    # Exercise the multi-step grid + ragged last batch block at small scale
    # (B=20 with tile=16 -> grid of 2, last block only partially valid).
    x2 = jax.random.normal(jax.random.PRNGKey(1), (20, 1, 28, 28), dtype=jnp.float32)
    logits2 = neural_net_forward(x2, prepared, batch_tile=16)
    jax.block_until_ready(logits2)
    assert logits2.shape == (20, 10), logits2.shape
    ref2 = reference_forward(x2, params)
    assert jnp.allclose(logits2, ref2, atol=5e-2, rtol=5e-2), (
        float(jnp.max(jnp.abs(logits2 - ref2))))

    print("KERNEL_OK")
</pallas_src>

<mosaic_0001>
module attributes {stable_mosaic.version = 11 : i64} {
  func.func @mlp_kernel(%arg0: i32, %arg1: memref<2x784xf32, #tpu.memory_space<vmem>>, %arg2: memref<784x128xbf16, #tpu.memory_space<vmem>>, %arg3: memref<1x128xf32, #tpu.memory_space<vmem>>, %arg4: memref<128x128xbf16, #tpu.memory_space<vmem>>, %arg5: memref<1x128xf32, #tpu.memory_space<vmem>>, %arg6: memref<128x10xbf16, #tpu.memory_space<vmem>>, %arg7: memref<1x10xf32, #tpu.memory_space<vmem>>, %arg8: memref<2x10xf32, #tpu.memory_space<vmem>>) attributes {dimension_semantics = [#tpu.dimension_semantics<parallel>], iteration_bounds = array<i64: 1>, scalar_prefetch = 0 : i64, scratch_operands = 0 : i64, tpu.core_type = #tpu.core_type<tc>, window_params = [{transform_indices = @transform_0, window_bounds = array<i64: 2, 784>}, {pipeline_mode = #tpu.pipeline_mode<synchronous>, transform_indices = @transform_1, window_bounds = array<i64: 784, 128>}, {pipeline_mode = #tpu.pipeline_mode<synchronous>, transform_indices = @transform_2, window_bounds = array<i64: 1, 128>}, {pipeline_mode = #tpu.pipeline_mode<synchronous>, transform_indices = @transform_3, window_bounds = array<i64: 128, 128>}, {pipeline_mode = #tpu.pipeline_mode<synchronous>, transform_indices = @transform_4, window_bounds = array<i64: 1, 128>}, {pipeline_mode = #tpu.pipeline_mode<synchronous>, transform_indices = @transform_5, window_bounds = array<i64: 128, 10>}, {pipeline_mode = #tpu.pipeline_mode<synchronous>, transform_indices = @transform_6, window_bounds = array<i64: 1, 10>}, {transform_indices = @transform_7, window_bounds = array<i64: 2, 10>}]} {
    %c0 = arith.constant 0 : index
    %c0_0 = arith.constant 0 : index
    %0 = vector.load %arg1[%c0, %c0_0] : memref<2x784xf32, #tpu.memory_space<vmem>>, vector<2x784xf32>
    %1 = arith.truncf %0 : vector<2x784xf32> to vector<2x784xbf16>
    %c0_1 = arith.constant 0 : index
    %c0_2 = arith.constant 0 : index
    %2 = vector.load %arg2[%c0_1, %c0_2] : memref<784x128xbf16, #tpu.memory_space<vmem>>, vector<784x128xbf16>
    %cst = arith.constant dense<0.000000e+00> : vector<2x128xf32>
    %3 = tpu.matmul %1, %2, %cst {dimension_numbers = #tpu.dot_dimension_numbers<[1], [0], [0], [1], [0, 0, 1, 1], [], []>} : vector<2x784xbf16>, vector<784x128xbf16>, vector<2x128xf32> -> vector<2x128xf32>
    %c0_3 = arith.constant 0 : index
    %c0_4 = arith.constant 0 : index
    %4 = vector.load %arg3[%c0_3, %c0_4] : memref<1x128xf32, #tpu.memory_space<vmem>>, vector<1x128xf32>
    %5 = vector.broadcast %4 : vector<1x128xf32> to vector<2x128xf32>
    %6 = arith.addf %3, %5 : vector<2x128xf32>
    %cst_5 = arith.constant 0.000000e+00 : f32
    %7 = vector.broadcast %cst_5 : f32 to vector<2x128xf32>
    %8 = arith.maximumf %6, %7 : vector<2x128xf32>
    %9 = arith.truncf %8 : vector<2x128xf32> to vector<2x128xbf16>
    %c0_6 = arith.constant 0 : index
    %c0_7 = arith.constant 0 : index
    %10 = vector.load %arg4[%c0_6, %c0_7] : memref<128x128xbf16, #tpu.memory_space<vmem>>, vector<128x128xbf16>
    %cst_8 = arith.constant dense<0.000000e+00> : vector<2x128xf32>
    %11 = tpu.matmul %9, %10, %cst_8 {dimension_numbers = #tpu.dot_dimension_numbers<[1], [0], [0], [1], [0, 0, 1, 1], [], []>} : vector<2x128xbf16>, vector<128x128xbf16>, vector<2x128xf32> -> vector<2x128xf32>
    %c0_9 = arith.constant 0 : index
    %c0_10 = arith.constant 0 : index
    %12 = vector.load %arg5[%c0_9, %c0_10] : memref<1x128xf32, #tpu.memory_space<vmem>>, vector<1x128xf32>
    %13 = vector.broadcast %12 : vector<1x128xf32> to vector<2x128xf32>
    %14 = arith.addf %11, %13 : vector<2x128xf32>
    %cst_11 = arith.constant 0.000000e+00 : f32
    %15 = vector.broadcast %cst_11 : f32 to vector<2x128xf32>
    %16 = arith.maximumf %14, %15 : vector<2x128xf32>
    %17 = arith.truncf %16 : vector<2x128xf32> to vector<2x128xbf16>
    %c0_12 = arith.constant 0 : index
    %c0_13 = arith.constant 0 : index
    %18 = vector.load %arg6[%c0_12, %c0_13] : memref<128x10xbf16, #tpu.memory_space<vmem>>, vector<128x10xbf16>
    %cst_14 = arith.constant dense<0.000000e+00> : vector<2x10xf32>
    %19 = tpu.matmul %17, %18, %cst_14 {dimension_numbers = #tpu.dot_dimension_numbers<[1], [0], [0], [1], [0, 0, 1, 1], [], []>} : vector<2x128xbf16>, vector<128x10xbf16>, vector<2x10xf32> -> vector<2x10xf32>
    %c0_15 = arith.constant 0 : index
    %c0_16 = arith.constant 0 : index
    %20 = vector.load %arg7[%c0_15, %c0_16] : memref<1x10xf32, #tpu.memory_space<vmem>>, vector<1x10xf32>
    %21 = vector.broadcast %20 : vector<1x10xf32> to vector<2x10xf32>
    %22 = arith.addf %19, %21 : vector<2x10xf32>
    %c0_17 = arith.constant 0 : index
    %c0_18 = arith.constant 0 : index
    %23 = vector.load %arg8[%c0_17, %c0_18] : memref<2x10xf32, #tpu.memory_space<vmem>>, vector<2x10xf32>
    tpu.vector_store %arg8[%c0_17, %c0_18], %22 {strides = array<i32>} : memref<2x10xf32, #tpu.memory_space<vmem>>, vector<2x10xf32>,
    return
  }
  func.func @transform_0(%arg0: i32) -> (i32, i32) {
    %c0_i32 = arith.constant 0 : i32
    %c0_i32_0 = arith.constant 0 : i32
    return %arg0, %c0_i32 : i32, i32
  }
  func.func @transform_1(%arg0: i32) -> (i32, i32) {
    %c0_i32 = arith.constant 0 : i32
    %c0_i32_0 = arith.constant 0 : i32
    %c0_i32_1 = arith.constant 0 : i32
    return %c0_i32, %c0_i32_0 : i32, i32
  }
  func.func @transform_2(%arg0: i32) -> (i32, i32) {
    %c0_i32 = arith.constant 0 : i32
    %c0_i32_0 = arith.constant 0 : i32
    %c0_i32_1 = arith.constant 0 : i32
    return %c0_i32, %c0_i32_0 : i32, i32
  }
  func.func @transform_3(%arg0: i32) -> (i32, i32) {
    %c0_i32 = arith.constant 0 : i32
    %c0_i32_0 = arith.constant 0 : i32
    %c0_i32_1 = arith.constant 0 : i32
    return %c0_i32, %c0_i32_0 : i32, i32
  }
  func.func @transform_4(%arg0: i32) -> (i32, i32) {
    %c0_i32 = arith.constant 0 : i32
    %c0_i32_0 = arith.constant 0 : i32
    %c0_i32_1 = arith.constant 0 : i32
    return %c0_i32, %c0_i32_0 : i32, i32
  }
  func.func @transform_5(%arg0: i32) -> (i32, i32) {
    %c0_i32 = arith.constant 0 : i32
    %c0_i32_0 = arith.constant 0 : i32
    %c0_i32_1 = arith.constant 0 : i32
    return %c0_i32, %c0_i32_0 : i32, i32
  }
  func.func @transform_6(%arg0: i32) -> (i32, i32) {
    %c0_i32 = arith.constant 0 : i32
    %c0_i32_0 = arith.constant 0 : i32
    %c0_i32_1 = arith.constant 0 : i32
    return %c0_i32, %c0_i32_0 : i32, i32
  }
  func.func @transform_7(%arg0: i32) -> (i32, i32) {
    %c0_i32 = arith.constant 0 : i32
    %c0_i32_0 = arith.constant 0 : i32
    return %arg0, %c0_i32 : i32, i32
  }
}

</mosaic_0001>

<llo_original>
// kernel: tpu_custom_call.1
$region0: #{tpu_custom_call.1}
  #allocation0 [shape = 'u32[]', space=smem, size = 0x4, offset = 0x4, fixed_abs, tag = 'smem constant byte address 0x4 - core index']
  #allocation1 [shape = 'u32[144,128]{1,0:T(1,128)}', space=vmem, size = 0x12000, scoped, tag = 'internal scratch']
  %s0 = inlined_call_operand.vmem [shape: f32[2,784], index: 0, kind: input, shape index: {}]
  %s1 = inlined_call_operand.hbm [shape: bf16[784,128], index: 1, kind: input, shape index: {}]
  %s2 = inlined_call_operand.vmem [shape: f32[1,128], index: 2, kind: input, shape index: {}]
  %s3 = inlined_call_operand.vmem [shape: bf16[128,128], index: 3, kind: input, shape index: {}]
  %s4 = inlined_call_operand.hbm [shape: f32[1,128], index: 4, kind: input, shape index: {}]
  %s5 = inlined_call_operand.vmem [shape: bf16[128,10], index: 5, kind: input, shape index: {}]
  %s6 = inlined_call_operand.vmem [shape: f32[1,10], index: 6, kind: input, shape index: {}]
  %s7 = inlined_call_operand.hbm [shape: f32[2,10], index: 7, kind: output, shape index: {}]
  %s8 = sld [smem:[#allocation0]]
  $region46: #{tpu_custom_call.1} parent=0
    _
  %s10 = ssub.s32 1, %s8
  %s11 = scalar_select 0, %s10, %s8
  $region1: #{tpu_custom_call.1} parent=0
    #allocation2 [shape = 'u8[200704]{0}', space=vmem, size = 0x31000, scoped, tag = 'input window, operand 1, single buffered']
    #allocation3 [shape = 's32[1]{0}', space=sflag, size = 0x4, scoped, tag = 'scoped memory for tpu_custom_call.1']
    #allocation4 [shape = 's32[1]{0}', space=sflag, size = 0x4, scoped, tag = 'scoped memory for tpu_custom_call.1']
    #allocation5 [shape = 'u8[512]{0}', space=vmem, size = 0x400, scoped, tag = 'input window, operand 4, single buffered']
    #allocation6 [shape = 's32[1]{0}', space=sflag, size = 0x4, scoped, tag = 'scoped memory for tpu_custom_call.1']
    #allocation7 [shape = 'u8[1024]{0}', space=vmem, size = 0x400, scoped, tag = 'output window, operand 0, single buffered']
    %12 = vsyncpa [#allocation3], 0
    %13 = vsyncpa [#allocation6], 0
    %14 = vsyncpa [#allocation4], 0
    // Predicated region
    $region2: #{tpu_custom_call.1} parent=1 // pred_check
      _
    $region3: #{tpu_custom_call.1} parent=1 // pred_check_branch
      %16 = sbr.rel (0) target = $region5
    $region4: #{tpu_custom_call.1} parent=1 // pred_region
      _
    $region5: #{tpu_custom_call.1} parent=1 // pred_fallthru
      _
    // Predicated region
    $region6: #{tpu_custom_call.1} parent=1 // pred_check
      _
    $region7: #{tpu_custom_call.1} parent=1 // pred_check_branch
      %18 = sbr.rel (0) target = $region9
    $region8: #{tpu_custom_call.1} parent=1 // pred_region
      %s20 = ssub.s32 6272, 6272
      %21 = vsyncadd [#allocation3], %s20
      %s22 = sshll.u32 [#allocation2], 4
      %s23 = int_to_ptr.vmem [resolvable:$true] %s22
      %28 = dma.hbm_to_vmem [thread:$0]  %s1, 6272, %s23, [#allocation3], 64, 64, 4
    $region9: #{tpu_custom_call.1} parent=1 // pred_fallthru
      _
    // Predicated region
    $region10: #{tpu_custom_call.1} parent=1 // pred_check
      _
    $region11: #{tpu_custom_call.1} parent=1 // pred_check_branch
      %30 = sbr.rel (0) target = $region13
    $region12: #{tpu_custom_call.1} parent=1 // pred_region
      _
    $region13: #{tpu_custom_call.1} parent=1 // pred_fallthru
      _
    // Predicated region
    $region14: #{tpu_custom_call.1} parent=1 // pred_check
      _
    $region15: #{tpu_custom_call.1} parent=1 // pred_check_branch
      %32 = sbr.rel (0) target = $region17
    $region16: #{tpu_custom_call.1} parent=1 // pred_region
      _
    $region17: #{tpu_custom_call.1} parent=1 // pred_fallthru
      _
    // Predicated region
    $region18: #{tpu_custom_call.1} parent=1 // pred_check
      _
    $region19: #{tpu_custom_call.1} parent=1 // pred_check_branch
      %34 = sbr.rel (0) target = $region21
    $region20: #{tpu_custom_call.1} parent=1 // pred_region
      %s36 = ssub.s32 16, 16
      %37 = vsyncadd [#allocation6], %s36
      %s39 = sshll.u32 [#allocation5], 4
      %s40 = int_to_ptr.vmem [resolvable:$true] %s39
      %42 = dma.hbm_to_vmem [thread:$0]  %s4, 16, %s40, [#allocation6]
    $region21: #{tpu_custom_call.1} parent=1 // pred_fallthru
      _
    // Predicated region
    $region22: #{tpu_custom_call.1} parent=1 // pred_check
      _
    $region23: #{tpu_custom_call.1} parent=1 // pred_check_branch
      %44 = sbr.rel (0) target = $region25
    $region24: #{tpu_custom_call.1} parent=1 // pred_region
      _
    $region25: #{tpu_custom_call.1} parent=1 // pred_fallthru
      _
    // Predicated region
    $region26: #{tpu_custom_call.1} parent=1 // pred_check
      _
    $region27: #{tpu_custom_call.1} parent=1 // pred_check_branch
      %46 = sbr.rel (0) target = $region29
    $region28: #{tpu_custom_call.1} parent=1 // pred_region
      _
    $region29: #{tpu_custom_call.1} parent=1 // pred_fallthru
      _
    // Predicated region
    $region30: #{tpu_custom_call.1} parent=1 // pred_check
      _
    $region31: #{tpu_custom_call.1} parent=1 // pred_check_branch
      %48 = sbr.rel (0) target = $region33
    $region32: #{tpu_custom_call.1} parent=1 // pred_region
      %49 = dma.done [#allocation3], 6272
    $region33: #{tpu_custom_call.1} parent=1 // pred_fallthru
      _
    // Predicated region
    $region34: #{tpu_custom_call.1} parent=1 // pred_check
      _
    $region35: #{tpu_custom_call.1} parent=1 // pred_check_branch
      %51 = sbr.rel (0) target = $region37
    $region36: #{tpu_custom_call.1} parent=1 // pred_region
      %52 = dma.done [#allocation6], 16
    $region37: #{tpu_custom_call.1} parent=1 // pred_fallthru
      _
    %v54 = vld [vmem:[%s0] sm:$0xff]
    %v55 = vld [vmem:[%s0 + $0x8] sm:$0x3f]
    %v58 = vcombine.high %v54, %v54
    %v60 = vunpack.c.l.s4 1983009808
    %v61 = vunpack.c.0.s8 %v60
    %v62 = vlaneseq
    %v63 = vshrl.u32 %v62, 7
    %v64 = vsub.s32 %v61, %v63
    %v65 = vrot.slane %v54, %v64
    %v67 = vunpack.c.l.s4 1983009808
    %v68 = vunpack.c.0.s8 %v67
    %v69 = vlaneseq
    %v70 = vshrl.u32 %v69, 7
    %v71 = vsub.s32 %v68, %v70
    %v72 = vrot.slane %v58, %v71
    %v73 = vcombine.high %v65, %v65
    %v74 = vcombine.high %v72, %v72
    %v75 = vcombine.high %v55, %v55
    %v77 = vunpack.c.l.s4 1983009808
    %v78 = vunpack.c.0.s8 %v77
    %v79 = vlaneseq
    %v80 = vshrl.u32 %v79, 7
    %v81 = vsub.s32 %v78, %v80
    %v82 = vrot.slane %v55, %v81
    %v84 = vunpack.c.l.s4 1983009808
    %v85 = vunpack.c.0.s8 %v84
    %v86 = vlaneseq
    %v87 = vshrl.u32 %v86, 7
    %v88 = vsub.s32 %v85, %v87
    %v89 = vrot.slane %v75, %v88
    %v90 = vcombine.high %v82, %v82
    %v98 = vpack.c.bf16 %v65, %v65
    %v99 = vpack.c.bf16 %v73, %v73
    %v100 = vpack.c.bf16 %v72, %v72
    %v101 = vpack.c.bf16 %v74, %v74
    %v102 = vpack.c.bf16 %v82, %v82
    %v103 = vpack.c.bf16 %v90, %v90
    %v104 = vpack.c.bf16 %v89, %v89
    %v105 = vld [vmem:[#allocation2] sm:$0xf]
    %v106 = vld [vmem:[#allocation2 + $0x4] sm:$0xf]
    %v107 = vld [vmem:[#allocation2 + $0x8] sm:$0xf]
    %v108 = vld [vmem:[#allocation2 + $0xc] sm:$0xf]
    %v109 = vld [vmem:[#allocation2 + $0x10] sm:$0xf]
    %v110 = vld [vmem:[#allocation2 + $0x14] sm:$0xf]
    %v111 = vld [vmem:[#allocation2 + $0x18] sm:$0xf]
    %v112 = vld [vmem:[#allocation2 + $0x1c] sm:$0xf]
    %v113 = vld [vmem:[#allocation2 + $0x20] sm:$0xf]
    %v114 = vld [vmem:[#allocation2 + $0x24] sm:$0xf]
    %v115 = vld [vmem:[#allocation2 + $0x28] sm:$0xf]
    %v116 = vld [vmem:[#allocation2 + $0x2c] sm:$0xf]
    %v117 = vld [vmem:[#allocation2 + $0x30] sm:$0xf]
    %v118 = vld [vmem:[#allocation2 + $0x34] sm:$0xf]
    %v119 = vld [vmem:[#allocation2 + $0x38] sm:$0xf]
    %v120 = vld [vmem:[#allocation2 + $0x3c] sm:$0xf]
    %v121 = vld [vmem:[#allocation2 + $0x40] sm:$0xf]
    %v122 = vld [vmem:[#allocation2 + $0x44] sm:$0xf]
    %v123 = vld [vmem:[#allocation2 + $0x48] sm:$0xf]
    %v124 = vld [vmem:[#allocation2 + $0x4c] sm:$0xf]
    %v125 = vld [vmem:[#allocation2 + $0x50] sm:$0xf]
    %v126 = vld [vmem:[#allocation2 + $0x54] sm:$0xf]
    %v127 = vld [vmem:[#allocation2 + $0x58] sm:$0xf]
    %v128 = vld [vmem:[#allocation2 + $0x5c] sm:$0xf]
    %v129 = vld [vmem:[#allocation2 + $0x60] sm:$0xf]
    %v130 = vld [vmem:[#allocation2 + $0x64] sm:$0xf]
    %v131 = vld [vmem:[#allocation2 + $0x68] sm:$0xf]
    %v132 = vld [vmem:[#allocation2 + $0x6c] sm:$0xf]
    %v133 = vld [vmem:[#allocation2 + $0x70] sm:$0xf]
    %v134 = vld [vmem:[#allocation2 + $0x74] sm:$0xf]
    %v135 = vld [vmem:[#allocation2 + $0x78] sm:$0xf]
    %v136 = vld [vmem:[#allocation2 + $0x7c] sm:$0xf]
    %v137 = vld [vmem:[#allocation2 + $0x80] sm:$0xf]
    %v138 = vld [vmem:[#allocation2 + $0x84] sm:$0xf]
    %v139 = vld [vmem:[#allocation2 + $0x88] sm:$0xf]
    %v140 = vld [vmem:[#allocation2 + $0x8c] sm:$0xf]
    %v141 = vld [vmem:[#allocation2 + $0x90] sm:$0xf]
    %v142 = vld [vmem:[#allocation2 + $0x94] sm:$0xf]
    %v143 = vld [vmem:[#allocation2 + $0x98] sm:$0xf]
    %v144 = vld [vmem:[#allocation2 + $0x9c] sm:$0xf]
    %v145 = vld [vmem:[#allocation2 + $0xa0] sm:$0xf]
    %v146 = vld [vmem:[#allocation2 + $0xa4] sm:$0xf]
    %v147 = vld [vmem:[#allocation2 + $0xa8] sm:$0xf]
    %v148 = vld [vmem:[#allocation2 + $0xac] sm:$0xf]
    %v149 = vld [vmem:[#allocation2 + $0xb0] sm:$0xf]
    %v150 = vld [vmem:[#allocation2 + $0xb4] sm:$0xf]
    %v151 = vld [vmem:[#allocation2 + $0xb8] sm:$0xf]
    %v152 = vld [vmem:[#allocation2 + $0xbc] sm:$0xf]
    %v153 = vld [vmem:[#allocation2 + $0xc0] sm:$0xf]
    %v154 = vld [vmem:[#allocation2 + $0xc4] sm:$0xf]
    %v155 = vld [vmem:[#allocation2 + $0xc8] sm:$0xf]
    %v156 = vld [vmem:[#allocation2 + $0xcc] sm:$0xf]
    %v157 = vld [vmem:[#allocation2 + $0xd0] sm:$0xf]
    %v158 = vld [vmem:[#allocation2 + $0xd4] sm:$0xf]
    %v159 = vld [vmem:[#allocation2 + $0xd8] sm:$0xf]
    %v160 = vld [vmem:[#allocation2 + $0xdc] sm:$0xf]
    %v161 = vld [vmem:[#allocation2 + $0xe0] sm:$0xf]
    %v162 = vld [vmem:[#allocation2 + $0xe4] sm:$0xf]
    %v163 = vld [vmem:[#allocation2 + $0xe8] sm:$0xf]
    %v164 = vld [vmem:[#allocation2 + $0xec] sm:$0xf]
    %v165 = vld [vmem:[#allocation2 + $0xf0] sm:$0xf]
    %v166 = vld [vmem:[#allocation2 + $0xf4] sm:$0xf]
    %v167 = vld [vmem:[#allocation2 + $0xf8] sm:$0xf]
    %v168 = vld [vmem:[#allocation2 + $0xfc] sm:$0xf]
    %v169 = vld [vmem:[#allocation2 + $0x100] sm:$0xf]
    %v170 = vld [vmem:[#allocation2 + $0x104] sm:$0xf]
    %v171 = vld [vmem:[#allocation2 + $0x108] sm:$0xf]
    %v172 = vld [vmem:[#allocation2 + $0x10c] sm:$0xf]
    %v173 = vld [vmem:[#allocation2 + $0x110] sm:$0xf]
    %v174 = vld [vmem:[#allocation2 + $0x114] sm:$0xf]
    %v175 = vld [vmem:[#allocation2 + $0x118] sm:$0xf]
    %v176 = vld [vmem:[#allocation2 + $0x11c] sm:$0xf]
    %v177 = vld [vmem:[#allocation2 + $0x120] sm:$0xf]
    %v178 = vld [vmem:[#allocation2 + $0x124] sm:$0xf]
    %v179 = vld [vmem:[#allocation2 + $0x128] sm:$0xf]
    %v180 = vld [vmem:[#allocation2 + $0x12c] sm:$0xf]
    %v181 = vld [vmem:[#allocation2 + $0x130] sm:$0xf]
    %v182 = vld [vmem:[#allocation2 + $0x134] sm:$0xf]
    %v183 = vld [vmem:[#allocation2 + $0x138] sm:$0xf]
    %v184 = vld [vmem:[#allocation2 + $0x13c] sm:$0xf]
    %v185 = vld [vmem:[#allocation2 + $0x140] sm:$0xf]
    %v186 = vld [vmem:[#allocation2 + $0x144] sm:$0xf]
    %v187 = vld [vmem:[#allocation2 + $0x148] sm:$0xf]
    %v188 = vld [vmem:[#allocation2 + $0x14c] sm:$0xf]
    %v189 = vld [vmem:[#allocation2 + $0x150] sm:$0xf]
    %v190 = vld [vmem:[#allocation2 + $0x154] sm:$0xf]
    %v191 = vld [vmem:[#allocation2 + $0x158] sm:$0xf]
    %v192 = vld [vmem:[#allocation2 + $0x15c] sm:$0xf]
    %v193 = vld [vmem:[#allocation2 + $0x160] sm:$0xf]
    %v194 = vld [vmem:[#allocation2 + $0x164] sm:$0xf]
    %v195 = vld [vmem:[#allocation2 + $0x168] sm:$0xf]
    %v196 = vld [vmem:[#allocation2 + $0x16c] sm:$0xf]
    %v197 = vld [vmem:[#allocation2 + $0x170] sm:$0xf]
    %v198 = vld [vmem:[#allocation2 + $0x174] sm:$0xf]
    %v199 = vld [vmem:[#allocation2 + $0x178] sm:$0xf]
    %v200 = vld [vmem:[#allocation2 + $0x17c] sm:$0xf]
    %v201 = vld [vmem:[#allocation2 + $0x180] sm:$0xf]
    %v202 = vld [vmem:[#allocation2 + $0x184] sm:$0xf]
    %v203 = vld [vmem:[%s2] sm:$0x1]
    %v205 = vlaneseq
    %v206 = vshrl.u32 %v205, 7
    %v207 = vsub.s32 0, %v206
    %v208 = vrot.slane %v203, %v207
    %v308 = vunpack.c.l.b16 %v105
    %v309 = vunpack.c.l.b16 %v106
    %v310 = vunpack.c.l.b16 %v107
    %v311 = vunpack.c.l.b16 %v108
    %v312 = vunpack.c.l.b16 %v109
    %v313 = vunpack.c.l.b16 %v110
    %v314 = vunpack.c.l.b16 %v111
    %v315 = vunpack.c.l.b16 %v112
    %v316 = vunpack.c.l.b16 %v113
    %v317 = vunpack.c.l.b16 %v114
    %v318 = vunpack.c.l.b16 %v115
    %v319 = vunpack.c.l.b16 %v116
    %v320 = vunpack.c.l.b16 %v117
    %v321 = vunpack.c.l.b16 %v118
    %v322 = vunpack.c.l.b16 %v119
    %v323 = vunpack.c.l.b16 %v120
    %v324 = vunpack.c.l.b16 %v121
    %v325 = vunpack.c.l.b16 %v122
    %v326 = vunpack.c.l.b16 %v123
    %v327 = vunpack.c.l.b16 %v124
    %v328 = vunpack.c.l.b16 %v125
    %v329 = vunpack.c.l.b16 %v126
    %v330 = vunpack.c.l.b16 %v127
    %v331 = vunpack.c.l.b16 %v128
    %v332 = vunpack.c.l.b16 %v129
    %v333 = vunpack.c.l.b16 %v130
    %v334 = vunpack.c.l.b16 %v131
    %v335 = vunpack.c.l.b16 %v132
    %v336 = vunpack.c.l.b16 %v133
    %v337 = vunpack.c.l.b16 %v134
    %v338 = vunpack.c.l.b16 %v135
    %v339 = vunpack.c.l.b16 %v136
    %v340 = vunpack.c.l.b16 %v137
    %v341 = vunpack.c.l.b16 %v138
    %v342 = vunpack.c.l.b16 %v139
    %v343 = vunpack.c.l.b16 %v140
    %v344 = vunpack.c.l.b16 %v141
    %v345 = vunpack.c.l.b16 %v142
    %v346 = vunpack.c.l.b16 %v143
    %v347 = vunpack.c.l.b16 %v144
    %v348 = vunpack.c.l.b16 %v145
    %v349 = vunpack.c.l.b16 %v146
    %v350 = vunpack.c.l.b16 %v147
    %v351 = vunpack.c.l.b16 %v148
    %v352 = vunpack.c.l.b16 %v149
    %v353 = vunpack.c.l.b16 %v150
    %v354 = vunpack.c.l.b16 %v151
    %v355 = vunpack.c.l.b16 %v152
    %v356 = vunpack.c.l.b16 %v153
    %v357 = vunpack.c.l.b16 %v154
    %v358 = vunpack.c.l.b16 %v155
    %v359 = vunpack.c.l.b16 %v156
    %v360 = vunpack.c.l.b16 %v157
    %v361 = vunpack.c.l.b16 %v158
    %v362 = vunpack.c.l.b16 %v159
    %v363 = vunpack.c.l.b16 %v160
    %v364 = vunpack.c.l.b16 %v161
    %v365 = vunpack.c.l.b16 %v162
    %v366 = vunpack.c.l.b16 %v163
    %v367 = vunpack.c.l.b16 %v164
    %v368 = vunpack.c.l.b16 %v165
    %v369 = vunpack.c.l.b16 %v166
    %v370 = vunpack.c.l.b16 %v167
    %v371 = vunpack.c.l.b16 %v168
    %v372 = vunpack.c.l.b16 %v169
    %v373 = vunpack.c.l.b16 %v170
    %v374 = vunpack.c.l.b16 %v171
    %v375 = vunpack.c.l.b16 %v172
    %v376 = vunpack.c.l.b16 %v173
    %v377 = vunpack.c.l.b16 %v174
    %v378 = vunpack.c.l.b16 %v175
    %v379 = vunpack.c.l.b16 %v176
    %v380 = vunpack.c.l.b16 %v177
    %v381 = vunpack.c.l.b16 %v178
    %v382 = vunpack.c.l.b16 %v179
    %v383 = vunpack.c.l.b16 %v180
    %v384 = vunpack.c.l.b16 %v181
    %v385 = vunpack.c.l.b16 %v182
    %v386 = vunpack.c.l.b16 %v183
    %v387 = vunpack.c.l.b16 %v184
    %v388 = vunpack.c.l.b16 %v185
    %v389 = vunpack.c.l.b16 %v186
    %v390 = vunpack.c.l.b16 %v187
    %v391 = vunpack.c.l.b16 %v188
    %v392 = vunpack.c.l.b16 %v189
    %v393 = vunpack.c.l.b16 %v190
    %v394 = vunpack.c.l.b16 %v191
    %v395 = vunpack.c.l.b16 %v192
    %v396 = vunpack.c.l.b16 %v193
    %v397 = vunpack.c.l.b16 %v194
    %v398 = vunpack.c.l.b16 %v195
    %v399 = vunpack.c.l.b16 %v196
    %v400 = vunpack.c.l.b16 %v197
    %v401 = vunpack.c.l.b16 %v198
    %v402 = vunpack.c.l.b16 %v199
    %v403 = vunpack.c.l.b16 %v200
    %v404 = vunpack.c.l.b16 %v201
    %v405 = vunpack.c.l.b16 %v202
    %v406 = vpack.c.b16 %v309, %v308
    %v407 = vpack.c.b16 %v311, %v310
    %v408 = vpack.c.b16 %v313, %v312
    %v409 = vpack.c.b16 %v315, %v314
    %v410 = vpack.c.b16 %v317, %v316
    %v411 = vpack.c.b16 %v319, %v318
    %v412 = vpack.c.b16 %v321, %v320
    %v413 = vpack.c.b16 %v323, %v322
    %v414 = vpack.c.b16 %v325, %v324
    %v415 = vpack.c.b16 %v327, %v326
    %v416 = vpack.c.b16 %v329, %v328
    %v417 = vpack.c.b16 %v331, %v330
    %v418 = vpack.c.b16 %v333, %v332
    %v419 = vpack.c.b16 %v335, %v334
    %v420 = vpack.c.b16 %v337, %v336
    %v421 = vpack.c.b16 %v339, %v338
    %v422 = vpack.c.b16 %v341, %v340
    %v423 = vpack.c.b16 %v343, %v342
    %v424 = vpack.c.b16 %v345, %v344
    %v425 = vpack.c.b16 %v347, %v346
    %v426 = vpack.c.b16 %v349, %v348
    %v427 = vpack.c.b16 %v351, %v350
    %v428 = vpack.c.b16 %v353, %v352
    %v429 = vpack.c.b16 %v355, %v354
    %v430 = vpack.c.b16 %v357, %v356
    %v431 = vpack.c.b16 %v359, %v358
    %v432 = vpack.c.b16 %v361, %v360
    %v433 = vpack.c.b16 %v363, %v362
    %v434 = vpack.c.b16 %v365, %v364
    %v435 = vpack.c.b16 %v367, %v366
    %v436 = vpack.c.b16 %v369, %v368
    %v437 = vpack.c.b16 %v371, %v370
    %v438 = vpack.c.b16 %v373, %v372
    %v439 = vpack.c.b16 %v375, %v374
    %v440 = vpack.c.b16 %v377, %v376
    %v441 = vpack.c.b16 %v379, %v378
    %v442 = vpack.c.b16 %v381, %v380
    %v443 = vpack.c.b16 %v383, %v382
    %v444 = vpack.c.b16 %v385, %v384
    %v445 = vpack.c.b16 %v387, %v386
    %v446 = vpack.c.b16 %v389, %v388
    %v447 = vpack.c.b16 %v391, %v390
    %v448 = vpack.c.b16 %v393, %v392
    %v449 = vpack.c.b16 %v395, %v394
    %v450 = vpack.c.b16 %v397, %v396
    %v451 = vpack.c.b16 %v399, %v398
    %v452 = vpack.c.b16 %v401, %v400
    %v453 = vpack.c.b16 %v403, %v402
    %v454 = vpack.c.b16 %v405, %v404
    %vm504 = vcmask 130048
    %v506 = vsel %vm504, %v104, 0
    %508 = vmatprep.subr.bf16.mxu0 0
    %509 = vmatpush1.bf16.msra.mxu0 %v406
    %510 = vmatprep.subr.bf16.mxu0 0
    %511 = vmatpush1.bf16.msra.mxu0 %v407
    %512 = vmatprep.subr.bf16.mxu0 0
    %513 = vmatpush1.bf16.msra.mxu0 %v408
    %514 = vmatprep.subr.bf16.mxu0 0
    %515 = vmatpush1.bf16.msra.mxu0 %v409
    %516 = vmatprep.subr.bf16.mxu0 0
    %517 = vmatpush1.bf16.msra.mxu0 %v410
    %518 = vmatprep.subr.bf16.mxu0 0
    %519 = vmatpush1.bf16.msra.mxu0 %v411
    %520 = vmatprep.subr.bf16.mxu0 0
    %521 = vmatpush1.bf16.msra.mxu0 %v412
    %522 = vmatprep.subr.bf16.mxu0 0
    %523 = vmatpush1.bf16.msra.mxu0 %v413
    %524 = vmatprep.subr.bf16.mxu0 0
    %525 = vmatpush1.bf16.msra.mxu0 %v414
    %526 = vmatprep.subr.bf16.mxu0 0
    %527 = vmatpush1.bf16.msra.mxu0 %v415
    %528 = vmatprep.subr.bf16.mxu0 0
    %529 = vmatpush1.bf16.msra.mxu0 %v416
    %530 = vmatprep.subr.bf16.mxu0 0
    %531 = vmatpush1.bf16.msra.mxu0 %v417
    %532 = vmatprep.subr.bf16.mxu0 0
    %533 = vmatpush1.bf16.msra.mxu0 %v418
    %534 = vmatprep.subr.bf16.mxu0 0
    %535 = vmatpush1.bf16.msra.mxu0 %v419
    %536 = vmatprep.subr.bf16.mxu0 0
    %537 = vmatpush1.bf16.msra.mxu0 %v420
    %538 = vmatprep.subr.bf16.mxu0 0
    %539 = vmatpush1.bf16.msra.mxu0 %v421
    %540 = vmatprep.mubr.bf16.mxu0 %v99
    %541 = vmatmul.mubr.bf16.gmra.mrb[0].mxu0 %v98
    %v542 = vpop.f32.mrb[0].mxu0
    %v543 = vadd.f32 %v208, %v542
    %v544 = vpop.f32.mrb[0].mxu0
    %v545 = vpop.f32.mrb[0].mxu0
    %v546 = vpop.f32.mrb[0].mxu0
    %547 = vdwg.mxu0
    %548 = vmatprep.subr.bf16.mxu0 0
    %549 = vmatpush1.bf16.msra.mxu0 %v422
    %550 = vmatprep.subr.bf16.mxu0 0
    %551 = vmatpush1.bf16.msra.mxu0 %v423
    %552 = vmatprep.subr.bf16.mxu0 0
    %553 = vmatpush1.bf16.msra.mxu0 %v424
    %554 = vmatprep.subr.bf16.mxu0 0
    %555 = vmatpush1.bf16.msra.mxu0 %v425
    %556 = vmatprep.subr.bf16.mxu0 0
    %557 = vmatpush1.bf16.msra.mxu0 %v426
    %558 = vmatprep.subr.bf16.mxu0 0
    %559 = vmatpush1.bf16.msra.mxu0 %v427
    %560 = vmatprep.subr.bf16.mxu0 0
    %561 = vmatpush1.bf16.msra.mxu0 %v428
    %562 = vmatprep.subr.bf16.mxu0 0
    %563 = vmatpush1.bf16.msra.mxu0 %v429
    %564 = vmatprep.subr.bf16.mxu0 0
    %565 = vmatpush1.bf16.msra.mxu0 %v430
    %566 = vmatprep.subr.bf16.mxu0 0
    %567 = vmatpush1.bf16.msra.mxu0 %v431
    %568 = vmatprep.subr.bf16.mxu0 0
    %569 = vmatpush1.bf16.msra.mxu0 %v432
    %570 = vmatprep.subr.bf16.mxu0 0
    %571 = vmatpush1.bf16.msra.mxu0 %v433
    %572 = vmatprep.subr.bf16.mxu0 0
    %573 = vmatpush1.bf16.msra.mxu0 %v434
    %574 = vmatprep.subr.bf16.mxu0 0
    %575 = vmatpush1.bf16.msra.mxu0 %v435
    %576 = vmatprep.subr.bf16.mxu0 0
    %577 = vmatpush1.bf16.msra.mxu0 %v436
    %578 = vmatprep.subr.bf16.mxu0 0
    %579 = vmatpush1.bf16.msra.mxu0 %v437
    %580 = vmatprep.mubr.bf16.mxu0 %v101
    %581 = vmatmul.mubr.bf16.gmra.mrb[0].mxu0 %v100
    %v582 = vpop.f32.mrb[0].mxu0
    %v583 = vadd.f32 %v543, %v582
    %v584 = vpop.f32.mrb[0].mxu0
    %v585 = vpop.f32.mrb[0].mxu0
    %v586 = vpop.f32.mrb[0].mxu0
    %587 = vdwg.mxu0
    %588 = vmatprep.subr.bf16.mxu0 0
    %589 = vmatpush1.bf16.msra.mxu0 %v438
    %590 = vmatprep.subr.bf16.mxu0 0
    %591 = vmatpush1.bf16.msra.mxu0 %v439
    %592 = vmatprep.subr.bf16.mxu0 0
    %593 = vmatpush1.bf16.msra.mxu0 %v440
    %594 = vmatprep.subr.bf16.mxu0 0
    %595 = vmatpush1.bf16.msra.mxu0 %v441
    %596 = vmatprep.subr.bf16.mxu0 0
    %597 = vmatpush1.bf16.msra.mxu0 %v442
    %598 = vmatprep.subr.bf16.mxu0 0
    %599 = vmatpush1.bf16.msra.mxu0 %v443
    %600 = vmatprep.subr.bf16.mxu0 0
    %601 = vmatpush1.bf16.msra.mxu0 %v444
    %602 = vmatprep.subr.bf16.mxu0 0
    %603 = vmatpush1.bf16.msra.mxu0 %v445
    %604 = vmatprep.subr.bf16.mxu0 0
    %605 = vmatpush1.bf16.msra.mxu0 %v446
    %606 = vmatprep.subr.bf16.mxu0 0
    %607 = vmatpush1.bf16.msra.mxu0 %v447
    %608 = vmatprep.subr.bf16.mxu0 0
    %609 = vmatpush1.bf16.msra.mxu0 %v448
    %610 = vmatprep.subr.bf16.mxu0 0
    %611 = vmatpush1.bf16.msra.mxu0 %v449
    %612 = vmatprep.subr.bf16.mxu0 0
    %613 = vmatpush1.bf16.msra.mxu0 %v450
    %614 = vmatprep.subr.bf16.mxu0 0
    %615 = vmatpush1.bf16.msra.mxu0 %v451
    %616 = vmatprep.subr.bf16.mxu0 0
    %617 = vmatpush1.bf16.msra.mxu0 %v452
    %618 = vmatprep.subr.bf16.mxu0 0
    %619 = vmatpush1.bf16.msra.mxu0 %v453
    %620 = vmatprep.mubr.bf16.mxu0 %v103
    %621 = vmatmul.mubr.bf16.gmra.mrb[0].mxu0 %v102
    %v622 = vpop.f32.mrb[0].mxu0
    %v623 = vadd.f32 %v583, %v622
    %v624 = vpop.f32.mrb[0].mxu0
    %v625 = vpop.f32.mrb[0].mxu0
    %v626 = vpop.f32.mrb[0].mxu0
    %627 = vdwg.mxu0
    %628 = vmatprep.subr.bf16.mxu0 0
    %629 = vmatpush1.bf16.msra.mxu0 %v454
    %630 = vmatprep.subr.bf16.mxu0 0
    %631 = vmatpush1.bf16.msra.mxu0 0
    %632 = vmatprep.subr.bf16.mxu0 0
    %633 = vmatpush1.bf16.msra.mxu0 0
    %634 = vmatprep.subr.bf16.mxu0 0
    %635 = vmatpush1.bf16.msra.mxu0 0
    %636 = vmatprep.subr.bf16.mxu0 0
    %637 = vmatpush1.bf16.msra.mxu0 0
    %638 = vmatprep.subr.bf16.mxu0 0
    %639 = vmatpush1.bf16.msra.mxu0 0
    %640 = vmatprep.subr.bf16.mxu0 0
    %641 = vmatpush1.bf16.msra.mxu0 0
    %642 = vmatprep.subr.bf16.mxu0 0
    %643 = vmatpush1.bf16.msra.mxu0 0
    %644 = vmatprep.subr.bf16.mxu0 0
    %645 = vmatpush1.bf16.msra.mxu0 0
    %646 = vmatprep.subr.bf16.mxu0 0
    %647 = vmatpush1.bf16.msra.mxu0 0
    %648 = vmatprep.subr.bf16.mxu0 0
    %649 = vmatpush1.bf16.msra.mxu0 0
    %650 = vmatprep.subr.bf16.mxu0 0
    %651 = vmatpush1.bf16.msra.mxu0 0
    %652 = vmatprep.subr.bf16.mxu0 0
    %653 = vmatpush1.bf16.msra.mxu0 0
    %654 = vmatprep.subr.bf16.mxu0 0
    %655 = vmatpush1.bf16.msra.mxu0 0
    %656 = vmatprep.subr.bf16.mxu0 0
    %657 = vmatpush1.bf16.msra.mxu0 0
    %658 = vmatprep.subr.bf16.mxu0 0
    %659 = vmatpush1.bf16.msra.mxu0 0
    %660 = vmatprep.mubr.bf16.mxu0 0
    %661 = vmatmul.mubr.bf16.gmra.mrb[0].mxu0 %v506
    %v662 = vpop.f32.mrb[0].mxu0
    %v663 = vadd.f32 %v623, %v662
    %v664 = vpop.f32.mrb[0].mxu0
    %v665 = vpop.f32.mrb[0].mxu0
    %v666 = vpop.f32.mrb[0].mxu0
    %667 = vdwg.mxu0
    %v668 = vmax.f32 %v663, 0.0
    %v669 = vpack.c.bf16 %v668, %v668
    %v670 = vld [vmem:[%s3] sm:$0xf]
    %v671 = vld [vmem:[%s3 + $0x4] sm:$0xf]
    %v672 = vld [vmem:[%s3 + $0x8] sm:$0xf]
    %v673 = vld [vmem:[%s3 + $0xc] sm:$0xf]
    %v674 = vld [vmem:[%s3 + $0x10] sm:$0xf]
    %v675 = vld [vmem:[%s3 + $0x14] sm:$0xf]
    %v676 = vld [vmem:[%s3 + $0x18] sm:$0xf]
    %v677 = vld [vmem:[%s3 + $0x1c] sm:$0xf]
    %v678 = vld [vmem:[%s3 + $0x20] sm:$0xf]
    %v679 = vld [vmem:[%s3 + $0x24] sm:$0xf]
    %v680 = vld [vmem:[%s3 + $0x28] sm:$0xf]
    %v681 = vld [vmem:[%s3 + $0x2c] sm:$0xf]
    %v682 = vld [vmem:[%s3 + $0x30] sm:$0xf]
    %v683 = vld [vmem:[%s3 + $0x34] sm:$0xf]
    %v684 = vld [vmem:[%s3 + $0x38] sm:$0xf]
    %v685 = vld [vmem:[%s3 + $0x3c] sm:$0xf]
    %v686 = vld [vmem:[#allocation5] sm:$0x1]
    %v688 = vlaneseq
    %v689 = vshrl.u32 %v688, 7
    %v690 = vsub.s32 0, %v689
    %v691 = vrot.slane %v686, %v690
    %v709 = vunpack.c.l.b16 %v670
    %v710 = vunpack.c.l.b16 %v671
    %v711 = vunpack.c.l.b16 %v672
    %v712 = vunpack.c.l.b16 %v673
    %v713 = vunpack.c.l.b16 %v674
    %v714 = vunpack.c.l.b16 %v675
    %v715 = vunpack.c.l.b16 %v676
    %v716 = vunpack.c.l.b16 %v677
    %v717 = vunpack.c.l.b16 %v678
    %v718 = vunpack.c.l.b16 %v679
    %v719 = vunpack.c.l.b16 %v680
    %v720 = vunpack.c.l.b16 %v681
    %v721 = vunpack.c.l.b16 %v682
    %v722 = vunpack.c.l.b16 %v683
    %v723 = vunpack.c.l.b16 %v684
    %v724 = vunpack.c.l.b16 %v685
    %v725 = vpack.c.b16 %v710, %v709
    %v726 = vpack.c.b16 %v712, %v711
    %v727 = vpack.c.b16 %v714, %v713
    %v728 = vpack.c.b16 %v716, %v715
    %v729 = vpack.c.b16 %v718, %v717
    %v730 = vpack.c.b16 %v720, %v719
    %v731 = vpack.c.b16 %v722, %v721
    %v732 = vpack.c.b16 %v724, %v723
    %741 = vmatprep.subr.bf16.mxu0 0
    %742 = vmatpush1.bf16.msra.mxu0 %v725
    %743 = vmatprep.subr.bf16.mxu0 0
    %744 = vmatpush1.bf16.msra.mxu0 %v726
    %745 = vmatprep.subr.bf16.mxu0 0
    %746 = vmatpush1.bf16.msra.mxu0 %v727
    %747 = vmatprep.subr.bf16.mxu0 0
    %748 = vmatpush1.bf16.msra.mxu0 %v728
    %749 = vmatprep.subr.bf16.mxu0 0
    %750 = vmatpush1.bf16.msra.mxu0 %v729
    %751 = vmatprep.subr.bf16.mxu0 0
    %752 = vmatpush1.bf16.msra.mxu0 %v730
    %753 = vmatprep.subr.bf16.mxu0 0
    %754 = vmatpush1.bf16.msra.mxu0 %v731
    %755 = vmatprep.subr.bf16.mxu0 0
    %756 = vmatpush1.bf16.msra.mxu0 %v732
    %757 = vmatprep.subr.bf16.mxu0 0
    %758 = vmatpush1.bf16.msra.mxu0 0
    %759 = vmatprep.subr.bf16.mxu0 0
    %760 = vmatpush1.bf16.msra.mxu0 0
    %761 = vmatprep.subr.bf16.mxu0 0
    %762 = vmatpush1.bf16.msra.mxu0 0
    %763 = vmatprep.subr.bf16.mxu0 0
    %764 = vmatpush1.bf16.msra.mxu0 0
    %765 = vmatprep.subr.bf16.mxu0 0
    %766 = vmatpush1.bf16.msra.mxu0 0
    %767 = vmatprep.subr.bf16.mxu0 0
    %768 = vmatpush1.bf16.msra.mxu0 0
    %769 = vmatprep.subr.bf16.mxu0 0
    %770 = vmatpush1.bf16.msra.mxu0 0
    %771 = vmatprep.subr.bf16.mxu0 0
    %772 = vmatpush1.bf16.msra.mxu0 0
    %773 = vmatprep.mubr.bf16.mxu0 0
    %774 = vmatmul.mubr.bf16.gmra.mrb[0].mxu0 %v669
    %v775 = vpop.f32.mrb[0].mxu0
    %v776 = vadd.f32 %v691, %v775
    %v777 = vpop.f32.mrb[0].mxu0
    %v778 = vpop.f32.mrb[0].mxu0
    %v779 = vpop.f32.mrb[0].mxu0
    %780 = vdwg.mxu0
    %v781 = vmax.f32 %v776, 0.0
    %v782 = vpack.c.bf16 %v781, %v781
    %v783 = vld [vmem:[%s5] sm:$0xf]
    %v784 = vld [vmem:[%s5 + $0x4] sm:$0xf]
    %v785 = vld [vmem:[%s5 + $0x8] sm:$0xf]
    %v786 = vld [vmem:[%s5 + $0xc] sm:$0xf]
    %v787 = vld [vmem:[%s5 + $0x10] sm:$0xf]
    %v788 = vld [vmem:[%s5 + $0x14] sm:$0xf]
    %v789 = vld [vmem:[%s5 + $0x18] sm:$0xf]
    %v790 = vld [vmem:[%s5 + $0x1c] sm:$0xf]
    %v791 = vld [vmem:[%s5 + $0x20] sm:$0xf]
    %v792 = vld [vmem:[%s5 + $0x24] sm:$0xf]
    %v793 = vld [vmem:[%s5 + $0x28] sm:$0xf]
    %v794 = vld [vmem:[%s5 + $0x2c] sm:$0xf]
    %v795 = vld [vmem:[%s5 + $0x30] sm:$0xf]
    %v796 = vld [vmem:[%s5 + $0x34] sm:$0xf]
    %v797 = vld [vmem:[%s5 + $0x38] sm:$0xf]
    %v798 = vld [vmem:[%s5 + $0x3c] sm:$0xf]
    %v799 = vld [vmem:[%s6] sm:$0x1]
    %v801 = vlaneseq
    %v802 = vshrl.u32 %v801, 7
    %v803 = vsub.s32 0, %v802
    %v804 = vrot.slane %v799, %v803
    %v822 = vunpack.c.l.b16 %v783
    %v823 = vunpack.c.l.b16 %v784
    %v824 = vunpack.c.l.b16 %v785
    %v825 = vunpack.c.l.b16 %v786
    %v826 = vunpack.c.l.b16 %v787
    %v827 = vunpack.c.l.b16 %v788
    %v828 = vunpack.c.l.b16 %v789
    %v829 = vunpack.c.l.b16 %v790
    %v830 = vunpack.c.l.b16 %v791
    %v831 = vunpack.c.l.b16 %v792
    %v832 = vunpack.c.l.b16 %v793
    %v833 = vunpack.c.l.b16 %v794
    %v834 = vunpack.c.l.b16 %v795
    %v835 = vunpack.c.l.b16 %v796
    %v836 = vunpack.c.l.b16 %v797
    %v837 = vunpack.c.l.b16 %v798
    %v838 = vpack.c.b16 %v823, %v822
    %v839 = vpack.c.b16 %v825, %v824
    %v840 = vpack.c.b16 %v827, %v826
    %v841 = vpack.c.b16 %v829, %v828
    %v842 = vpack.c.b16 %v831, %v830
    %v843 = vpack.c.b16 %v833, %v832
    %v844 = vpack.c.b16 %v835, %v834
    %v845 = vpack.c.b16 %v837, %v836
    %854 = vmatprep.subr.bf16.mxu0 0
    %855 = vmatpush1.bf16.msra.mxu0 %v838
    %856 = vmatprep.subr.bf16.mxu0 0
    %857 = vmatpush1.bf16.msra.mxu0 %v839
    %858 = vmatprep.subr.bf16.mxu0 0
    %859 = vmatpush1.bf16.msra.mxu0 %v840
    %860 = vmatprep.subr.bf16.mxu0 0
    %861 = vmatpush1.bf16.msra.mxu0 %v841
    %862 = vmatprep.subr.bf16.mxu0 0
    %863 = vmatpush1.bf16.msra.mxu0 %v842
    %864 = vmatprep.subr.bf16.mxu0 0
    %865 = vmatpush1.bf16.msra.mxu0 %v843
    %866 = vmatprep.subr.bf16.mxu0 0
    %867 = vmatpush1.bf16.msra.mxu0 %v844
    %868 = vmatprep.subr.bf16.mxu0 0
    %869 = vmatpush1.bf16.msra.mxu0 %v845
    %870 = vmatprep.subr.bf16.mxu0 0
    %871 = vmatpush1.bf16.msra.mxu0 0
    %872 = vmatprep.subr.bf16.mxu0 0
    %873 = vmatpush1.bf16.msra.mxu0 0
    %874 = vmatprep.subr.bf16.mxu0 0
    %875 = vmatpush1.bf16.msra.mxu0 0
    %876 = vmatprep.subr.bf16.mxu0 0
    %877 = vmatpush1.bf16.msra.mxu0 0
    %878 = vmatprep.subr.bf16.mxu0 0
    %879 = vmatpush1.bf16.msra.mxu0 0
    %880 = vmatprep.subr.bf16.mxu0 0
    %881 = vmatpush1.bf16.msra.mxu0 0
    %882 = vmatprep.subr.bf16.mxu0 0
    %883 = vmatpush1.bf16.msra.mxu0 0
    %884 = vmatprep.subr.bf16.mxu0 0
    %885 = vmatpush1.bf16.msra.mxu0 0
    %886 = vmatprep.mubr.bf16.mxu0 0
    %887 = vmatmul.mubr.bf16.gmra.mrb[0].mxu0 %v782
    %v888 = vpop.f32.mrb[0].mxu0
    %v889 = vadd.f32 %v804, %v888
    %v890 = vpop.f32.mrb[0].mxu0
    %v891 = vpop.f32.mrb[0].mxu0
    %v892 = vpop.f32.mrb[0].mxu0
    %893 = vdwg.mxu0
    %vm894 = vcmask 74752
    %895 = vst.msk [vmem:[#allocation7] sm:$0x3] %vm894, %v889
    // Predicated region
    $region38: #{tpu_custom_call.1} parent=1 // pred_check
      _
    $region39: #{tpu_custom_call.1} parent=1 // pred_check_branch
      %897 = sbr.rel (0) target = $region41
    $region40: #{tpu_custom_call.1} parent=1 // pred_region
      %s899 = ssub.s32 32, 32
      %900 = vsyncadd [#allocation4], %s899
      %s902 = sshll.u32 [#allocation7], 4
      %s903 = int_to_ptr.vmem [resolvable:$true] %s902
      %905 = dma.vmem_to_hbm [thread:$0]  %s903, 32, %s7, [#allocation4]
    $region41: #{tpu_custom_call.1} parent=1 // pred_fallthru
      _
    // Predicated region
    $region42: #{tpu_custom_call.1} parent=1 // pred_check
      _
    $region43: #{tpu_custom_call.1} parent=1 // pred_check_branch
      %907 = sbr.rel (0) target = $region45
    $region44: #{tpu_custom_call.1} parent=1 // pred_region
      %908 = dma.done [#allocation4], 32
    $region45: #{tpu_custom_call.1} parent=1 // pred_fallthru
      _
    %909 = vsyncpa [#allocation3], 1
    %910 = vsyncpa [#allocation6], 1
    %911 = vsyncpa [#allocation4], 1

</llo_original>
